<compile_context>
chip_gen: v7x
topology: tpu7x:2x2x1
jax: 0.10.0
libtpu: 0.0.40
codegen_flags: <defaults>
</compile_context>

<pallas_src>
import jax
import jax.numpy as jnp
import numpy as np
from jax.experimental import pallas as pl
from jax.experimental.pallas import tpu as pltpu


def inverse_kernel(a_ref, b_ref, w1a_ref, w1b_ref, b1_ref, w2_ref, b2_ref, o_ref):
    cd = w1a_ref.dtype                      # bf16 MXU operand dtype
    a = a_ref[...].astype(cd)               # in-kernel cast (free VPU work)
    b = b_ref[...].astype(cd)

    # layer1 with the concat folded into two matmuls (f32 accumulation).
    h = (jnp.dot(a, w1a_ref[...], preferred_element_type=jnp.float32)
         + jnp.dot(b, w1b_ref[...], preferred_element_type=jnp.float32)
         + b1_ref[...])                                              # (TB, H) f32
    h = jnp.maximum(h, 0.0)                                          # ReLU in f32

    # layer2 (bf16 MXU operands, f32 accumulation + f32 bias).
    logits = jnp.dot(h.astype(cd), w2_ref[...],
                     preferred_element_type=jnp.float32) + b2_ref[...]   # (TB, A)

    # Numerically stable softmax over the feature (lane) axis, all in f32.
    m = jnp.max(logits, axis=-1, keepdims=True)
    e = jnp.exp(logits - m)
    d = jnp.sum(e, axis=-1, keepdims=True)
    r = pl.reciprocal(d, approx=True)          # EUP slot (otherwise idle)
    r = r * (2.0 - d * r)                      # one Newton step: ~1e-7 rel error
    o_ref[...] = (e * r).astype(o_ref.dtype)


def prepare_params(w1, b1, w2, b2, compute_dtype=jnp.bfloat16):
    """One-time parameter prep (hoisted out of the per-call path).

    w1: (H, 2C) and w2: (A, H) in PyTorch nn.Linear layout.
    Returns (w1a, w1b, b1, w2t, b2) with weights pre-transposed to (in, out),
    w1 split so w1a pairs with enc_state and w1b with enc_state1 (preserving
    the original concat ordering), MXU operands in bf16 and biases kept in
    f32 as (1, out) rows.
    """
    H, twoC = w1.shape
    C = twoC // 2
    A = w2.shape[0]
    w1a = jnp.asarray(w1[:, :C].T, compute_dtype)        # (C, H)
    w1b = jnp.asarray(w1[:, C:].T, compute_dtype)        # (C, H)
    b1r = jnp.asarray(b1, jnp.float32).reshape(1, H)
    w2t = jnp.asarray(w2.T, compute_dtype)               # (H, A)
    b2r = jnp.asarray(b2, jnp.float32).reshape(1, A)
    return (w1a, w1b, b1r, w2t, b2r)


def _round_up(x, m):
    return ((x + m - 1) // m) * m


def _choose_batch_tile(B, block_b):
    """Batch tile: full batch for tiny B, else a multiple of 16 capped so the
    parallel grid axis has >= 2 steps (v7x megacore) and <= block_b rows."""
    if B <= 16:
        return B                                   # block == full dim is legal
    half = -(-B // 2)                              # ceil(B/2)
    tb = min(block_b, _round_up(half, 16))
    return max(tb, 16)


def inverse_forward(enc_state, enc_state1, params, *, block_b=4096):
    """enc_state, enc_state1: (B, curiosity_size) float32; params from prepare_params."""
    w1a, w1b, b1r, w2t, b2r = params
    B, C = enc_state.shape
    H = w1a.shape[1]
    A = w2t.shape[1]

    tb = _choose_batch_tile(B, block_b)
    grid = (pl.cdiv(B, tb),)

    # Explicit VMEM budget: f32 I/O blocks are lane-padded to 128 and
    # double-buffered; weights/biases are tiny and resident.
    lane = 128
    io_bytes = (2 * 2 * tb * lane * 4) + (2 * tb * lane * 4)   # 2 inputs + 1 output
    w_bytes = (2 * C * H + H * A) * 2 + (H + A) * 4
    vmem_limit = min(int(1.5 * (io_bytes + w_bytes)) + (1 << 20), 48 << 20)

    row_spec = lambda shape: pl.BlockSpec(shape, lambda i: (i, 0))   # tiled over batch
    rep_spec = lambda shape: pl.BlockSpec(shape, lambda i: (0, 0))   # resident (weights)

    return pl.pallas_call(
        inverse_kernel,
        out_shape=jax.ShapeDtypeStruct((B, A), jnp.float32),
        grid=grid,
        in_specs=[
            row_spec((tb, C)),     # enc_state   (f32, cast in-kernel)
            row_spec((tb, C)),     # enc_state1  (f32, cast in-kernel)
            rep_spec((C, H)),      # w1a = w1[:, :C]^T  (bf16)
            rep_spec((C, H)),      # w1b = w1[:, C:]^T  (bf16)
            rep_spec((1, H)),      # b1 (f32)
            rep_spec((H, A)),      # w2^T (bf16)
            rep_spec((1, A)),      # b2 (f32)
        ],
        out_specs=row_spec((tb, A)),
        compiler_params=pltpu.CompilerParams(
            dimension_semantics=("parallel",),
            vmem_limit_bytes=vmem_limit),
    )(enc_state, enc_state1, w1a, w1b, b1r, w2t, b2r)


def inverse_reference_mixed(enc_state, enc_state1, params):
    """Pure-JAX reference with the same mixed precision as the kernel."""
    w1a, w1b, b1r, w2t, b2r = params
    cd = w1a.dtype
    a = enc_state.astype(cd)
    b = enc_state1.astype(cd)
    h = (jnp.dot(a, w1a, preferred_element_type=jnp.float32)
         + jnp.dot(b, w1b, preferred_element_type=jnp.float32) + b1r)
    h = jnp.maximum(h, 0.0)
    logits = jnp.dot(h.astype(cd), w2t, preferred_element_type=jnp.float32) + b2r
    return jax.nn.softmax(logits, axis=-1)


def inverse_reference_f32(enc_state, enc_state1, w1, b1, w2, b2):
    """Pure-f32 reference matching the original PyTorch module semantics."""
    x = jnp.concatenate([enc_state, enc_state1], axis=1)
    h = jnp.maximum(x @ w1.T + b1, 0.0)
    logits = h @ w2.T + b2
    return jax.nn.softmax(logits, axis=1)


if __name__ == "__main__":
    # Module hyperparameters (small, consistent with the forward's shapes).
    curiosity_size = 32
    hidden_size = 2 * curiosity_size          # 64
    action_size = 4
    batch = 8

    key = jax.random.PRNGKey(0)
    k1, k2, k3, k4, k5, k6 = jax.random.split(key, 6)

    # Deterministic synthetic parameters (PyTorch nn.Linear layouts).
    w1 = jax.random.normal(k1, (hidden_size, 2 * curiosity_size), jnp.float32) * 0.1
    b1 = jax.random.normal(k2, (hidden_size,), jnp.float32) * 0.1
    w2 = jax.random.normal(k3, (action_size, hidden_size), jnp.float32) * 0.1
    b2 = jax.random.normal(k4, (action_size,), jnp.float32) * 0.1

    # Inputs: already-encoded state / next state features, shape (B, curiosity_size).
    enc_state = jax.random.normal(k5, (batch, curiosity_size), jnp.float32)
    enc_state1 = jax.random.normal(k6, (batch, curiosity_size), jnp.float32)

    # One-time parameter preparation (transpose/split/cast hoisted out of the call).
    params = prepare_params(w1, b1, w2, b2)

    # --- Small-batch path (single tile, grid=1) -----------------------------
    out = jax.block_until_ready(inverse_forward(enc_state, enc_state1, params))

    ref_mp = inverse_reference_mixed(enc_state, enc_state1, params)
    np.testing.assert_allclose(np.asarray(out), np.asarray(ref_mp),
                               rtol=1e-3, atol=1e-5)

    ref_f32 = inverse_reference_f32(enc_state, enc_state1, w1, b1, w2, b2)
    np.testing.assert_allclose(np.asarray(out), np.asarray(ref_f32),
                               rtol=5e-2, atol=5e-3)

    # --- Multi-tile path (grid>1, padded tail tile) --------------------------
    k7, k8 = jax.random.split(jax.random.PRNGKey(1))
    B2 = 40                                   # -> tb=32, grid=2, tail of 8 rows
    es2 = jax.random.normal(k7, (B2, curiosity_size), jnp.float32)
    es12 = jax.random.normal(k8, (B2, curiosity_size), jnp.float32)
    out2 = jax.block_until_ready(inverse_forward(es2, es12, params))
    ref2 = inverse_reference_mixed(es2, es12, params)
    np.testing.assert_allclose(np.asarray(out2), np.asarray(ref2),
                               rtol=1e-3, atol=1e-5)

    print("KERNEL_OK")
</pallas_src>

<mosaic_0001>
module attributes {stable_mosaic.version = 11 : i64} {
  func.func @inverse_kernel(%arg0: i32, %arg1: memref<8x32xf32, #tpu.memory_space<vmem>>, %arg2: memref<8x32xf32, #tpu.memory_space<vmem>>, %arg3: memref<32x64xbf16, #tpu.memory_space<vmem>>, %arg4: memref<32x64xbf16, #tpu.memory_space<vmem>>, %arg5: memref<1x64xf32, #tpu.memory_space<vmem>>, %arg6: memref<64x4xbf16, #tpu.memory_space<vmem>>, %arg7: memref<1x4xf32, #tpu.memory_space<vmem>>, %arg8: memref<8x4xf32, #tpu.memory_space<vmem>>) attributes {dimension_semantics = [#tpu.dimension_semantics<parallel>], iteration_bounds = array<i64: 1>, scalar_prefetch = 0 : i64, scratch_operands = 0 : i64, tpu.core_type = #tpu.core_type<tc>, window_params = [{transform_indices = @transform_0, window_bounds = array<i64: 8, 32>}, {transform_indices = @transform_1, window_bounds = array<i64: 8, 32>}, {pipeline_mode = #tpu.pipeline_mode<synchronous>, transform_indices = @transform_2, window_bounds = array<i64: 32, 64>}, {pipeline_mode = #tpu.pipeline_mode<synchronous>, transform_indices = @transform_3, window_bounds = array<i64: 32, 64>}, {pipeline_mode = #tpu.pipeline_mode<synchronous>, transform_indices = @transform_4, window_bounds = array<i64: 1, 64>}, {pipeline_mode = #tpu.pipeline_mode<synchronous>, transform_indices = @transform_5, window_bounds = array<i64: 64, 4>}, {pipeline_mode = #tpu.pipeline_mode<synchronous>, transform_indices = @transform_6, window_bounds = array<i64: 1, 4>}, {transform_indices = @transform_7, window_bounds = array<i64: 8, 4>}]} {
    %c0 = arith.constant 0 : index
    %c0_0 = arith.constant 0 : index
    %0 = vector.load %arg1[%c0, %c0_0] : memref<8x32xf32, #tpu.memory_space<vmem>>, vector<8x32xf32>
    %1 = arith.truncf %0 : vector<8x32xf32> to vector<8x32xbf16>
    %c0_1 = arith.constant 0 : index
    %c0_2 = arith.constant 0 : index
    %2 = vector.load %arg2[%c0_1, %c0_2] : memref<8x32xf32, #tpu.memory_space<vmem>>, vector<8x32xf32>
    %3 = arith.truncf %2 : vector<8x32xf32> to vector<8x32xbf16>
    %c0_3 = arith.constant 0 : index
    %c0_4 = arith.constant 0 : index
    %4 = vector.load %arg3[%c0_3, %c0_4] : memref<32x64xbf16, #tpu.memory_space<vmem>>, vector<32x64xbf16>
    %cst = arith.constant dense<0.000000e+00> : vector<8x64xf32>
    %5 = tpu.matmul %1, %4, %cst {dimension_numbers = #tpu.dot_dimension_numbers<[1], [0], [0], [1], [0, 0, 1, 1], [], []>} : vector<8x32xbf16>, vector<32x64xbf16>, vector<8x64xf32> -> vector<8x64xf32>
    %c0_5 = arith.constant 0 : index
    %c0_6 = arith.constant 0 : index
    %6 = vector.load %arg4[%c0_5, %c0_6] : memref<32x64xbf16, #tpu.memory_space<vmem>>, vector<32x64xbf16>
    %cst_7 = arith.constant dense<0.000000e+00> : vector<8x64xf32>
    %7 = tpu.matmul %3, %6, %cst_7 {dimension_numbers = #tpu.dot_dimension_numbers<[1], [0], [0], [1], [0, 0, 1, 1], [], []>} : vector<8x32xbf16>, vector<32x64xbf16>, vector<8x64xf32> -> vector<8x64xf32>
    %8 = arith.addf %5, %7 : vector<8x64xf32>
    %c0_8 = arith.constant 0 : index
    %c0_9 = arith.constant 0 : index
    %9 = vector.load %arg5[%c0_8, %c0_9] : memref<1x64xf32, #tpu.memory_space<vmem>>, vector<1x64xf32>
    %10 = vector.broadcast %9 : vector<1x64xf32> to vector<8x64xf32>
    %11 = arith.addf %8, %10 : vector<8x64xf32>
    %cst_10 = arith.constant 0.000000e+00 : f32
    %12 = vector.broadcast %cst_10 : f32 to vector<8x64xf32>
    %13 = arith.maximumf %11, %12 : vector<8x64xf32>
    %14 = arith.truncf %13 : vector<8x64xf32> to vector<8x64xbf16>
    %c0_11 = arith.constant 0 : index
    %c0_12 = arith.constant 0 : index
    %15 = vector.load %arg6[%c0_11, %c0_12] : memref<64x4xbf16, #tpu.memory_space<vmem>>, vector<64x4xbf16>
    %cst_13 = arith.constant dense<0.000000e+00> : vector<8x4xf32>
    %16 = tpu.matmul %14, %15, %cst_13 {dimension_numbers = #tpu.dot_dimension_numbers<[1], [0], [0], [1], [0, 0, 1, 1], [], []>} : vector<8x64xbf16>, vector<64x4xbf16>, vector<8x4xf32> -> vector<8x4xf32>
    %c0_14 = arith.constant 0 : index
    %c0_15 = arith.constant 0 : index
    %17 = vector.load %arg7[%c0_14, %c0_15] : memref<1x4xf32, #tpu.memory_space<vmem>>, vector<1x4xf32>
    %18 = vector.broadcast %17 : vector<1x4xf32> to vector<8x4xf32>
    %19 = arith.addf %16, %18 : vector<8x4xf32>
    %cst_16 = arith.constant dense<0xFF800000> : vector<8xf32>
    %20 = vector.multi_reduction <maximumf>, %19, %cst_16 [1] : vector<8x4xf32> to vector<8xf32>
    %21 = vector.shape_cast %20 : vector<8xf32> to vector<8x1xf32>
    %22 = vector.broadcast %21 : vector<8x1xf32> to vector<8x4xf32>
    %23 = arith.subf %19, %22 : vector<8x4xf32>
    %24 = math.exp %23 : vector<8x4xf32>
    %cst_17 = arith.constant dense<0.000000e+00> : vector<8xf32>
    %25 = vector.multi_reduction <add>, %24, %cst_17 [1] : vector<8x4xf32> to vector<8xf32>
    %26 = vector.shape_cast %25 : vector<8xf32> to vector<8x1xf32>
    %27 = tpu.reciprocal %26 {approx = true} : vector<8x1xf32> -> vector<8x1xf32>
    %28 = arith.mulf %26, %27 : vector<8x1xf32>
    %cst_18 = arith.constant 2.000000e+00 : f32
    %29 = vector.broadcast %cst_18 : f32 to vector<8x1xf32>
    %30 = arith.subf %29, %28 : vector<8x1xf32>
    %31 = arith.mulf %27, %30 : vector<8x1xf32>
    %32 = vector.broadcast %31 : vector<8x1xf32> to vector<8x4xf32>
    %33 = arith.mulf %24, %32 : vector<8x4xf32>
    %c0_19 = arith.constant 0 : index
    %c0_20 = arith.constant 0 : index
    %34 = vector.load %arg8[%c0_19, %c0_20] : memref<8x4xf32, #tpu.memory_space<vmem>>, vector<8x4xf32>
    tpu.vector_store %arg8[%c0_19, %c0_20], %33 {strides = array<i32>} : memref<8x4xf32, #tpu.memory_space<vmem>>, vector<8x4xf32>,
    return
  }
  func.func @transform_0(%arg0: i32) -> (i32, i32) {
    %c0_i32 = arith.constant 0 : i32
    %c0_i32_0 = arith.constant 0 : i32
    return %arg0, %c0_i32 : i32, i32
  }
  func.func @transform_1(%arg0: i32) -> (i32, i32) {
    %c0_i32 = arith.constant 0 : i32
    %c0_i32_0 = arith.constant 0 : i32
    return %arg0, %c0_i32 : i32, i32
  }
  func.func @transform_2(%arg0: i32) -> (i32, i32) {
    %c0_i32 = arith.constant 0 : i32
    %c0_i32_0 = arith.constant 0 : i32
    %c0_i32_1 = arith.constant 0 : i32
    return %c0_i32, %c0_i32_0 : i32, i32
  }
  func.func @transform_3(%arg0: i32) -> (i32, i32) {
    %c0_i32 = arith.constant 0 : i32
    %c0_i32_0 = arith.constant 0 : i32
    %c0_i32_1 = arith.constant 0 : i32
    return %c0_i32, %c0_i32_0 : i32, i32
  }
  func.func @transform_4(%arg0: i32) -> (i32, i32) {
    %c0_i32 = arith.constant 0 : i32
    %c0_i32_0 = arith.constant 0 : i32
    %c0_i32_1 = arith.constant 0 : i32
    return %c0_i32, %c0_i32_0 : i32, i32
  }
  func.func @transform_5(%arg0: i32) -> (i32, i32) {
    %c0_i32 = arith.constant 0 : i32
    %c0_i32_0 = arith.constant 0 : i32
    %c0_i32_1 = arith.constant 0 : i32
    return %c0_i32, %c0_i32_0 : i32, i32
  }
  func.func @transform_6(%arg0: i32) -> (i32, i32) {
    %c0_i32 = arith.constant 0 : i32
    %c0_i32_0 = arith.constant 0 : i32
    %c0_i32_1 = arith.constant 0 : i32
    return %c0_i32, %c0_i32_0 : i32, i32
  }
  func.func @transform_7(%arg0: i32) -> (i32, i32) {
    %c0_i32 = arith.constant 0 : i32
    %c0_i32_0 = arith.constant 0 : i32
    return %arg0, %c0_i32 : i32, i32
  }
}

</mosaic_0001>

<llo_original>
// kernel: tpu_custom_call.1
$region0: #{tpu_custom_call.1}
  #allocation0 [shape = 'u32[]', space=smem, size = 0x4, offset = 0x4, fixed_abs, tag = 'smem constant byte address 0x4 - core index']
  #allocation1 [shape = 'u32[144,128]{1,0:T(1,128)}', space=vmem, size = 0x12000, scoped, tag = 'internal scratch']
  %s0 = inlined_call_operand.hbm [shape: f32[8,32], index: 0, kind: input, shape index: {}]
  %s1 = inlined_call_operand.hbm [shape: f32[8,32], index: 1, kind: input, shape index: {}]
  %s2 = inlined_call_operand.vmem [shape: bf16[32,64], index: 2, kind: input, shape index: {}]
  %s3 = inlined_call_operand.vmem [shape: bf16[32,64], index: 3, kind: input, shape index: {}]
  %s4 = inlined_call_operand.vmem [shape: f32[1,64], index: 4, kind: input, shape index: {}]
  %s5 = inlined_call_operand.vmem [shape: bf16[64,4], index: 5, kind: input, shape index: {}]
  %s6 = inlined_call_operand.vmem [shape: f32[1,4], index: 6, kind: input, shape index: {}]
  %s7 = inlined_call_operand.vmem [shape: f32[8,4], index: 7, kind: output, shape index: {}]
  %s8 = sld [smem:[#allocation0]]
  $region46: #{tpu_custom_call.1} parent=0
    _
  %s10 = ssub.s32 1, %s8
  %s11 = scalar_select 0, %s10, %s8
  $region1: #{tpu_custom_call.1} parent=0
    #allocation2 [shape = 'u8[4096]{0}', space=vmem, size = 0x1000, scoped, tag = 'input window, operand 0, single buffered']
    #allocation3 [shape = 's32[1]{0}', space=sflag, size = 0x4, scoped, tag = 'scoped memory for tpu_custom_call.1']
    #allocation4 [shape = 'u8[4096]{0}', space=vmem, size = 0x1000, scoped, tag = 'input window, operand 1, single buffered']
    #allocation5 [shape = 's32[1]{0}', space=sflag, size = 0x4, scoped, tag = 'scoped memory for tpu_custom_call.1']
    %12 = vsyncpa [#allocation3], 0
    %13 = vsyncpa [#allocation5], 0
    // Predicated region
    $region2: #{tpu_custom_call.1} parent=1 // pred_check
      _
    $region3: #{tpu_custom_call.1} parent=1 // pred_check_branch
      %15 = sbr.rel (0) target = $region5
    $region4: #{tpu_custom_call.1} parent=1 // pred_region
      %s17 = ssub.s32 128, 128
      %18 = vsyncadd [#allocation3], %s17
      %s20 = sshll.u32 [#allocation2], 4
      %s21 = int_to_ptr.vmem [resolvable:$true] %s20
      %23 = dma.hbm_to_vmem [thread:$0]  %s0, 128, %s21, [#allocation3]
    $region5: #{tpu_custom_call.1} parent=1 // pred_fallthru
      _
    // Predicated region
    $region6: #{tpu_custom_call.1} parent=1 // pred_check
      _
    $region7: #{tpu_custom_call.1} parent=1 // pred_check_branch
      %25 = sbr.rel (0) target = $region9
    $region8: #{tpu_custom_call.1} parent=1 // pred_region
      %s27 = ssub.s32 128, 128
      %28 = vsyncadd [#allocation5], %s27
      %s30 = sshll.u32 [#allocation4], 4
      %s31 = int_to_ptr.vmem [resolvable:$true] %s30
      %33 = dma.hbm_to_vmem [thread:$0]  %s1, 128, %s31, [#allocation5]
    $region9: #{tpu_custom_call.1} parent=1 // pred_fallthru
      _
    // Predicated region
    $region10: #{tpu_custom_call.1} parent=1 // pred_check
      _
    $region11: #{tpu_custom_call.1} parent=1 // pred_check_branch
      %35 = sbr.rel (0) target = $region13
    $region12: #{tpu_custom_call.1} parent=1 // pred_region
      _
    $region13: #{tpu_custom_call.1} parent=1 // pred_fallthru
      _
    // Predicated region
    $region14: #{tpu_custom_call.1} parent=1 // pred_check
      _
    $region15: #{tpu_custom_call.1} parent=1 // pred_check_branch
      %37 = sbr.rel (0) target = $region17
    $region16: #{tpu_custom_call.1} parent=1 // pred_region
      _
    $region17: #{tpu_custom_call.1} parent=1 // pred_fallthru
      _
    // Predicated region
    $region18: #{tpu_custom_call.1} parent=1 // pred_check
      _
    $region19: #{tpu_custom_call.1} parent=1 // pred_check_branch
      %39 = sbr.rel (0) target = $region21
    $region20: #{tpu_custom_call.1} parent=1 // pred_region
      _
    $region21: #{tpu_custom_call.1} parent=1 // pred_fallthru
      _
    // Predicated region
    $region22: #{tpu_custom_call.1} parent=1 // pred_check
      _
    $region23: #{tpu_custom_call.1} parent=1 // pred_check_branch
      %41 = sbr.rel (0) target = $region25
    $region24: #{tpu_custom_call.1} parent=1 // pred_region
      _
    $region25: #{tpu_custom_call.1} parent=1 // pred_fallthru
      _
    // Predicated region
    $region26: #{tpu_custom_call.1} parent=1 // pred_check
      _
    $region27: #{tpu_custom_call.1} parent=1 // pred_check_branch
      %43 = sbr.rel (0) target = $region29
    $region28: #{tpu_custom_call.1} parent=1 // pred_region
      _
    $region29: #{tpu_custom_call.1} parent=1 // pred_fallthru
      _
    // Predicated region
    $region30: #{tpu_custom_call.1} parent=1 // pred_check
      _
    $region31: #{tpu_custom_call.1} parent=1 // pred_check_branch
      %45 = sbr.rel (0) target = $region33
    $region32: #{tpu_custom_call.1} parent=1 // pred_region
      %46 = dma.done [#allocation3], 128
    $region33: #{tpu_custom_call.1} parent=1 // pred_fallthru
      _
    // Predicated region
    $region34: #{tpu_custom_call.1} parent=1 // pred_check
      _
    $region35: #{tpu_custom_call.1} parent=1 // pred_check_branch
      %48 = sbr.rel (0) target = $region37
    $region36: #{tpu_custom_call.1} parent=1 // pred_region
      %49 = dma.done [#allocation5], 128
    $region37: #{tpu_custom_call.1} parent=1 // pred_fallthru
      _
    %v51 = vld [vmem:[#allocation2] sm:$0xff]
    %v52 = vpack.c.bf16 %v51, %v51
    %v53 = vld [vmem:[#allocation4] sm:$0xff]
    %v54 = vpack.c.bf16 %v53, %v53
    %v55 = vld [vmem:[%s2] sm:$0xf]
    %v56 = vld [vmem:[%s2 + $0x4] sm:$0xf]
    %v57 = vld [vmem:[%s2 + $0x8] sm:$0xf]
    %v58 = vld [vmem:[%s2 + $0xc] sm:$0xf]
    %v59 = vld [vmem:[%s3] sm:$0xf]
    %v60 = vld [vmem:[%s3 + $0x4] sm:$0xf]
    %v61 = vld [vmem:[%s3 + $0x8] sm:$0xf]
    %v62 = vld [vmem:[%s3 + $0xc] sm:$0xf]
    %v67 = vunpack.c.l.b16 %v59
    %v68 = vunpack.c.l.b16 %v60
    %v69 = vunpack.c.l.b16 %v61
    %v70 = vunpack.c.l.b16 %v62
    %v71 = vpack.c.b16 %v68, %v67
    %v72 = vpack.c.b16 %v70, %v69
    %vm75 = vcmask 261120
    %v77 = vsel %vm75, %v54, 0
    %79 = vmatprep.subr.bf16.mxu0 0
    %80 = vmatpush1.bf16.msra.mxu0 %v71
    %81 = vmatprep.subr.bf16.mxu0 0
    %82 = vmatpush1.bf16.msra.mxu0 %v72
    %83 = vmatprep.subr.bf16.mxu0 0
    %84 = vmatpush1.bf16.msra.mxu0 0
    %85 = vmatprep.subr.bf16.mxu0 0
    %86 = vmatpush1.bf16.msra.mxu0 0
    %87 = vmatprep.subr.bf16.mxu0 0
    %88 = vmatpush1.bf16.msra.mxu0 0
    %89 = vmatprep.subr.bf16.mxu0 0
    %90 = vmatpush1.bf16.msra.mxu0 0
    %91 = vmatprep.subr.bf16.mxu0 0
    %92 = vmatpush1.bf16.msra.mxu0 0
    %93 = vmatprep.subr.bf16.mxu0 0
    %94 = vmatpush1.bf16.msra.mxu0 0
    %95 = vmatprep.subr.bf16.mxu0 0
    %96 = vmatpush1.bf16.msra.mxu0 0
    %97 = vmatprep.subr.bf16.mxu0 0
    %98 = vmatpush1.bf16.msra.mxu0 0
    %99 = vmatprep.subr.bf16.mxu0 0
    %100 = vmatpush1.bf16.msra.mxu0 0
    %101 = vmatprep.subr.bf16.mxu0 0
    %102 = vmatpush1.bf16.msra.mxu0 0
    %103 = vmatprep.subr.bf16.mxu0 0
    %104 = vmatpush1.bf16.msra.mxu0 0
    %105 = vmatprep.subr.bf16.mxu0 0
    %106 = vmatpush1.bf16.msra.mxu0 0
    %107 = vmatprep.subr.bf16.mxu0 0
    %108 = vmatpush1.bf16.msra.mxu0 0
    %109 = vmatprep.subr.bf16.mxu0 0
    %110 = vmatpush1.bf16.msra.mxu0 0
    %111 = vmatprep.mubr.bf16.mxu0 0
    %112 = vmatmul.mubr.bf16.gmra.mrb[0].mxu0 %v77
    %v113 = vpop.f32.mrb[0].mxu0
    %v114 = vadd.f32 0.0, %v113
    %v115 = vpop.f32.mrb[0].mxu0
    %v116 = vpop.f32.mrb[0].mxu0
    %v117 = vpop.f32.mrb[0].mxu0
    %118 = vdwg.mxu0
    %v123 = vunpack.c.l.b16 %v55
    %v124 = vunpack.c.l.b16 %v56
    %v125 = vunpack.c.l.b16 %v57
    %v126 = vunpack.c.l.b16 %v58
    %v127 = vpack.c.b16 %v124, %v123
    %v128 = vpack.c.b16 %v126, %v125
    %v132 = vsel %vm75, %v52, 0
    %134 = vmatprep.subr.bf16.mxu0 0
    %135 = vmatpush1.bf16.msra.mxu0 %v127
    %136 = vmatprep.subr.bf16.mxu0 0
    %137 = vmatpush1.bf16.msra.mxu0 %v128
    %138 = vmatprep.subr.bf16.mxu0 0
    %139 = vmatpush1.bf16.msra.mxu0 0
    %140 = vmatprep.subr.bf16.mxu0 0
    %141 = vmatpush1.bf16.msra.mxu0 0
    %142 = vmatprep.subr.bf16.mxu0 0
    %143 = vmatpush1.bf16.msra.mxu0 0
    %144 = vmatprep.subr.bf16.mxu0 0
    %145 = vmatpush1.bf16.msra.mxu0 0
    %146 = vmatprep.subr.bf16.mxu0 0
    %147 = vmatpush1.bf16.msra.mxu0 0
    %148 = vmatprep.subr.bf16.mxu0 0
    %149 = vmatpush1.bf16.msra.mxu0 0
    %150 = vmatprep.subr.bf16.mxu0 0
    %151 = vmatpush1.bf16.msra.mxu0 0
    %152 = vmatprep.subr.bf16.mxu0 0
    %153 = vmatpush1.bf16.msra.mxu0 0
    %154 = vmatprep.subr.bf16.mxu0 0
    %155 = vmatpush1.bf16.msra.mxu0 0
    %156 = vmatprep.subr.bf16.mxu0 0
    %157 = vmatpush1.bf16.msra.mxu0 0
    %158 = vmatprep.subr.bf16.mxu0 0
    %159 = vmatpush1.bf16.msra.mxu0 0
    %160 = vmatprep.subr.bf16.mxu0 0
    %161 = vmatpush1.bf16.msra.mxu0 0
    %162 = vmatprep.subr.bf16.mxu0 0
    %163 = vmatpush1.bf16.msra.mxu0 0
    %164 = vmatprep.subr.bf16.mxu0 0
    %165 = vmatpush1.bf16.msra.mxu0 0
    %166 = vmatprep.mubr.bf16.mxu0 0
    %167 = vmatmul.mubr.bf16.gmra.mrb[0].mxu0 %v132
    %v168 = vpop.f32.mrb[0].mxu0
    %v169 = vadd.f32 %v114, %v168
    %v170 = vpop.f32.mrb[0].mxu0
    %v171 = vpop.f32.mrb[0].mxu0
    %v172 = vpop.f32.mrb[0].mxu0
    %173 = vdwg.mxu0
    %v174 = vld [vmem:[%s4] sm:$0x1]
    %v176 = vlaneseq
    %v177 = vshrl.u32 %v176, 7
    %v178 = vsub.s32 0, %v177
    %v179 = vrot.slane %v174, %v178
    %v181 = vadd.f32 %v169, %v179
    %v182 = vmax.f32 %v181, 0.0
    %v183 = vpack.c.bf16 %v182, %v182
    %v184 = vld [vmem:[%s5] sm:$0xf]
    %v185 = vld [vmem:[%s5 + $0x4] sm:$0xf]
    %v186 = vld [vmem:[%s5 + $0x8] sm:$0xf]
    %v187 = vld [vmem:[%s5 + $0xc] sm:$0xf]
    %v188 = vld [vmem:[%s5 + $0x10] sm:$0xf]
    %v189 = vld [vmem:[%s5 + $0x14] sm:$0xf]
    %v190 = vld [vmem:[%s5 + $0x18] sm:$0xf]
    %v191 = vld [vmem:[%s5 + $0x1c] sm:$0xf]
    %v192 = vld [vmem:[%s6] sm:$0x1]
    %v194 = vlaneseq
    %v195 = vshrl.u32 %v194, 7
    %v196 = vsub.s32 0, %v195
    %v197 = vrot.slane %v192, %v196
    %v207 = vunpack.c.l.b16 %v184
    %v208 = vunpack.c.l.b16 %v185
    %v209 = vunpack.c.l.b16 %v186
    %v210 = vunpack.c.l.b16 %v187
    %v211 = vunpack.c.l.b16 %v188
    %v212 = vunpack.c.l.b16 %v189
    %v213 = vunpack.c.l.b16 %v190
    %v214 = vunpack.c.l.b16 %v191
    %v215 = vpack.c.b16 %v208, %v207
    %v216 = vpack.c.b16 %v210, %v209
    %v217 = vpack.c.b16 %v212, %v211
    %v218 = vpack.c.b16 %v214, %v213
    %vm223 = vcmask 523264
    %v225 = vsel %vm223, %v183, 0
    %227 = vmatprep.subr.bf16.mxu0 0
    %228 = vmatpush1.bf16.msra.mxu0 %v215
    %229 = vmatprep.subr.bf16.mxu0 0
    %230 = vmatpush1.bf16.msra.mxu0 %v216
    %231 = vmatprep.subr.bf16.mxu0 0
    %232 = vmatpush1.bf16.msra.mxu0 %v217
    %233 = vmatprep.subr.bf16.mxu0 0
    %234 = vmatpush1.bf16.msra.mxu0 %v218
    %235 = vmatprep.subr.bf16.mxu0 0
    %236 = vmatpush1.bf16.msra.mxu0 0
    %237 = vmatprep.subr.bf16.mxu0 0
    %238 = vmatpush1.bf16.msra.mxu0 0
    %239 = vmatprep.subr.bf16.mxu0 0
    %240 = vmatpush1.bf16.msra.mxu0 0
    %241 = vmatprep.subr.bf16.mxu0 0
    %242 = vmatpush1.bf16.msra.mxu0 0
    %243 = vmatprep.subr.bf16.mxu0 0
    %244 = vmatpush1.bf16.msra.mxu0 0
    %245 = vmatprep.subr.bf16.mxu0 0
    %246 = vmatpush1.bf16.msra.mxu0 0
    %247 = vmatprep.subr.bf16.mxu0 0
    %248 = vmatpush1.bf16.msra.mxu0 0
    %249 = vmatprep.subr.bf16.mxu0 0
    %250 = vmatpush1.bf16.msra.mxu0 0
    %251 = vmatprep.subr.bf16.mxu0 0
    %252 = vmatpush1.bf16.msra.mxu0 0
    %253 = vmatprep.subr.bf16.mxu0 0
    %254 = vmatpush1.bf16.msra.mxu0 0
    %255 = vmatprep.subr.bf16.mxu0 0
    %256 = vmatpush1.bf16.msra.mxu0 0
    %257 = vmatprep.subr.bf16.mxu0 0
    %258 = vmatpush1.bf16.msra.mxu0 0
    %259 = vmatprep.mubr.bf16.mxu0 0
    %260 = vmatmul.mubr.bf16.gmra.mrb[0].mxu0 %v225
    %v261 = vpop.f32.mrb[0].mxu0
    %v262 = vadd.f32 %v197, %v261
    %v263 = vpop.f32.mrb[0].mxu0
    %v264 = vpop.f32.mrb[0].mxu0
    %v265 = vpop.f32.mrb[0].mxu0
    %266 = vdwg.mxu0
    %vm267 = vcmask 31744
    %v268 = vsel %vm267, %v262, -inf
    %269 = vmax.xlane.f32.xlu0 %v268
    %v270 = vpop.xlane.xlu0 %269
    %v271 = vsub.f32 %v262, %v270
    %v272 = vmul.f32 %v271, 1.442695
    %v273 = vpow.pop %v272
    %v274 = vsel %vm267, %v273, 0.0
    %275 = vadd.xlane.f32.xlu0 %v274
    %v276 = vpop.xlane.xlu0 %275
    %v277 = vrcp.pop %v276
    %v278 = vmul.f32 %v276, %v277
    %v279 = vsub.f32 2.0, %v278
    %v280 = vmul.f32 %v277, %v279
    %v281 = vmul.f32 %v273, %v280
    %282 = vst.msk [vmem:[%s7] sm:$0xff] %vm267, %v281
    // Predicated region
    $region38: #{tpu_custom_call.1} parent=1 // pred_check
      _
    $region39: #{tpu_custom_call.1} parent=1 // pred_check_branch
      %284 = sbr.rel (0) target = $region41
    $region40: #{tpu_custom_call.1} parent=1 // pred_region
      _
    $region41: #{tpu_custom_call.1} parent=1 // pred_fallthru
      _
    // Predicated region
    $region42: #{tpu_custom_call.1} parent=1 // pred_check
      _
    $region43: #{tpu_custom_call.1} parent=1 // pred_check_branch
      %286 = sbr.rel (0) target = $region45
    $region44: #{tpu_custom_call.1} parent=1 // pred_region
      _
    $region45: #{tpu_custom_call.1} parent=1 // pred_fallthru
      _
    %287 = vsyncpa [#allocation3], 1
    %288 = vsyncpa [#allocation5], 1

</llo_original>
